<compile_context>
chip_gen: v6e
topology: v6e:2x2x1
jax: 0.10.0
libtpu: 0.0.40
codegen_flags: <defaults>
</compile_context>

<pallas_src>
import math

import jax
import jax.numpy as jnp
from jax.experimental import pallas as pl
from jax.experimental.pallas import tpu as pltpu


def _round_up(x, m):
    return ((x + m - 1) // m) * m


def _critic_kernel(s_ref, a_ref, w1s_ref, w1a_ref, b1_ref,
                   w2_ref, b2_ref, w3_ref, b3_ref, out_ref):
    s = s_ref[...]                                    # [TB, S]
    a = a_ref[...]                                    # [TB, A]
    # fc1 with the concat fused:  [s a] @ [[w1_s],[w1_a]] == s@w1_s + a@w1_a
    h1 = jnp.dot(s, w1s_ref[...], preferred_element_type=jnp.float32)
    h1 = h1 + jnp.dot(a, w1a_ref[...], preferred_element_type=jnp.float32)
    h1 = jnp.maximum(h1 + b1_ref[...], 0.0)           # [TB, H1p]
    # fc2 + ReLU
    h2 = jnp.dot(h1, w2_ref[...], preferred_element_type=jnp.float32)
    h2 = jnp.maximum(h2 + b2_ref[...], 0.0)           # [TB, H2p]
    # fc3: single output column -> VPU multiply + XLU lane-reduce instead of
    # a 1-wide (heavily padded) MXU matmul.
    q = jnp.sum(h2 * w3_ref[...], axis=-1, keepdims=True) + b3_ref[...]
    out_ref[...] = q.astype(out_ref.dtype)            # [TB, 1]


def critic_forward(state, action, params, *, block_rows=512):
    """Pallas forward pass of Critic.  state: [B,S], action: [B,A] -> [B,1]."""
    w1, b1, w2, b2, w3, b3 = params
    batch, state_dim = state.shape
    action_dim = action.shape[1]
    hidden1 = w1.shape[1]
    hidden2 = w2.shape[1]

    # ---- lane-pad hidden dims to multiples of 128 (zero cols contribute 0).
    h1p = _round_up(hidden1, 128)
    h2p = _round_up(hidden2, 128)
    w1s = jnp.pad(w1[:state_dim], ((0, 0), (0, h1p - hidden1)))
    w1a = jnp.pad(w1[state_dim:], ((0, 0), (0, h1p - hidden1)))
    b1p = jnp.pad(b1, ((0, 0), (0, h1p - hidden1)))
    w2p = jnp.pad(w2, ((0, h1p - hidden1), (0, h2p - hidden2)))
    b2p = jnp.pad(b2, ((0, 0), (0, h2p - hidden2)))
    w3p = jnp.pad(w3.reshape(1, hidden2), ((0, 0), (0, h2p - hidden2)))
    b3p = b3.reshape(1, 1)

    # ---- batch tiling (tile is a multiple of 8; batch padded to tile).
    tb = _round_up(min(block_rows, _round_up(batch, 8)), 8)
    batch_p = _round_up(batch, tb)
    if batch_p != batch:
        state = jnp.pad(state, ((0, batch_p - batch), (0, 0)))
        action = jnp.pad(action, ((0, batch_p - batch), (0, 0)))
    grid = (batch_p // tb,)

    # ---- advisory cost estimate for the XLA scheduler.
    flops = 2 * batch_p * (state_dim * h1p + action_dim * h1p + h1p * h2p + h2p)
    bytes_accessed = 4 * (state.size + action.size + w1s.size + w1a.size
                          + b1p.size + w2p.size + b2p.size + w3p.size
                          + b3p.size + batch_p)
    cost = pl.CostEstimate(flops=flops, transcendentals=0,
                           bytes_accessed=bytes_accessed)

    def resident(shape):
        # Weights/biases: same block every grid step -> stay resident in VMEM.
        return pl.BlockSpec(shape, lambda i: (0, 0))

    out = pl.pallas_call(
        _critic_kernel,
        out_shape=jax.ShapeDtypeStruct((batch_p, 1), jnp.float32),
        grid=grid,
        in_specs=[
            pl.BlockSpec((tb, state_dim), lambda i: (i, 0)),   # state tile
            pl.BlockSpec((tb, action_dim), lambda i: (i, 0)),  # action tile
            resident((state_dim, h1p)),                        # w1_s
            resident((action_dim, h1p)),                       # w1_a
            resident((1, h1p)),                                # b1
            resident((h1p, h2p)),                              # w2
            resident((1, h2p)),                                # b2
            resident((1, h2p)),                                # w3 (row)
            resident((1, 1)),                                  # b3
        ],
        out_specs=pl.BlockSpec((tb, 1), lambda i: (i, 0)),
        compiler_params=pltpu.CompilerParams(
            dimension_semantics=("parallel",)),
        cost_estimate=cost,
    )(state, action, w1s, w1a, b1p, w2p, b2p, w3p, b3p)
    return out[:batch]


def init_critic_params(key, state_dim, action_dim, hidden1, hidden2):
    """Deterministic init mirroring PyTorch nn.Linear default
    (uniform(-1/sqrt(fan_in), 1/sqrt(fan_in)) for both weight and bias)."""
    def linear(key, fan_in, fan_out):
        kw, kb = jax.random.split(key)
        bound = 1.0 / math.sqrt(fan_in)
        w = jax.random.uniform(kw, (fan_in, fan_out), jnp.float32,
                               minval=-bound, maxval=bound)
        b = jax.random.uniform(kb, (1, fan_out), jnp.float32,
                               minval=-bound, maxval=bound)
        return w, b

    k1, k2, k3 = jax.random.split(key, 3)
    w1, b1 = linear(k1, state_dim + action_dim, hidden1)
    w2, b2 = linear(k2, hidden1, hidden2)
    w3, b3 = linear(k3, hidden2, 1)
    return (w1, b1, w2, b2, w3, b3)


def critic_reference(state, action, params):
    """Pure-JAX reference for correctness check."""
    w1, b1, w2, b2, w3, b3 = params
    x = jnp.concatenate([state, action], axis=1)
    x = jnp.maximum(x @ w1 + b1, 0.0)
    x = jnp.maximum(x @ w2 + b2, 0.0)
    return x @ w3 + b3


if __name__ == "__main__":
    # Small shapes consistent with Critic(state_dim, action_dim, h1, h2).
    state_dim, action_dim, hidden1, hidden2 = 16, 8, 32, 32

    key = jax.random.PRNGKey(0)
    k_params, k_state, k_action = jax.random.split(key, 3)
    params = init_critic_params(k_params, state_dim, action_dim,
                                hidden1, hidden2)

    # 1) toy batch (single grid step)
    batch = 8
    state = jax.random.normal(k_state, (batch, state_dim), jnp.float32)
    action = jax.random.normal(k_action, (batch, action_dim), jnp.float32)
    q = jax.block_until_ready(critic_forward(state, action, params))
    q_ref = critic_reference(state, action, params)
    assert q.shape == (batch, 1)
    assert jnp.allclose(q, q_ref, atol=1e-5, rtol=1e-5)

    # 2) non-multiple-of-tile batch (exercises grid > 1 + remainder padding)
    batch2 = 1000
    state2 = jax.random.normal(k_state, (batch2, state_dim), jnp.float32)
    action2 = jax.random.normal(k_action, (batch2, action_dim), jnp.float32)
    q2 = jax.block_until_ready(
        critic_forward(state2, action2, params, block_rows=256))
    q2_ref = critic_reference(state2, action2, params)
    assert q2.shape == (batch2, 1)
    assert jnp.allclose(q2, q2_ref, atol=1e-5, rtol=1e-5)

    print("KERNEL_OK")
</pallas_src>

<mosaic_0001>
module attributes {stable_mosaic.version = 11 : i64} {
  func.func @_critic_kernel(%arg0: i32, %arg1: memref<8x16xf32, #tpu.memory_space<vmem>>, %arg2: memref<8x8xf32, #tpu.memory_space<vmem>>, %arg3: memref<16x128xf32, #tpu.memory_space<vmem>>, %arg4: memref<8x128xf32, #tpu.memory_space<vmem>>, %arg5: memref<1x128xf32, #tpu.memory_space<vmem>>, %arg6: memref<128x128xf32, #tpu.memory_space<vmem>>, %arg7: memref<1x128xf32, #tpu.memory_space<vmem>>, %arg8: memref<1x128xf32, #tpu.memory_space<vmem>>, %arg9: memref<1x1xf32, #tpu.memory_space<vmem>>, %arg10: memref<8x1xf32, #tpu.memory_space<vmem>>) attributes {dimension_semantics = [#tpu.dimension_semantics<parallel>], iteration_bounds = array<i64: 1>, scalar_prefetch = 0 : i64, scratch_operands = 0 : i64, tpu.core_type = #tpu.core_type<tc>, window_params = [{transform_indices = @transform_0, window_bounds = array<i64: 8, 16>}, {transform_indices = @transform_1, window_bounds = array<i64: 8, 8>}, {pipeline_mode = #tpu.pipeline_mode<synchronous>, transform_indices = @transform_2, window_bounds = array<i64: 16, 128>}, {pipeline_mode = #tpu.pipeline_mode<synchronous>, transform_indices = @transform_3, window_bounds = array<i64: 8, 128>}, {pipeline_mode = #tpu.pipeline_mode<synchronous>, transform_indices = @transform_4, window_bounds = array<i64: 1, 128>}, {pipeline_mode = #tpu.pipeline_mode<synchronous>, transform_indices = @transform_5, window_bounds = array<i64: 128, 128>}, {pipeline_mode = #tpu.pipeline_mode<synchronous>, transform_indices = @transform_6, window_bounds = array<i64: 1, 128>}, {pipeline_mode = #tpu.pipeline_mode<synchronous>, transform_indices = @transform_7, window_bounds = array<i64: 1, 128>}, {pipeline_mode = #tpu.pipeline_mode<synchronous>, transform_indices = @transform_8, window_bounds = array<i64: 1, 1>}, {transform_indices = @transform_9, window_bounds = array<i64: 8, 1>}]} {
    %c0 = arith.constant 0 : index
    %c0_0 = arith.constant 0 : index
    %0 = vector.load %arg1[%c0, %c0_0] : memref<8x16xf32, #tpu.memory_space<vmem>>, vector<8x16xf32>
    %c0_1 = arith.constant 0 : index
    %c0_2 = arith.constant 0 : index
    %1 = vector.load %arg2[%c0_1, %c0_2] : memref<8x8xf32, #tpu.memory_space<vmem>>, vector<8x8xf32>
    %c0_3 = arith.constant 0 : index
    %c0_4 = arith.constant 0 : index
    %2 = vector.load %arg3[%c0_3, %c0_4] : memref<16x128xf32, #tpu.memory_space<vmem>>, vector<16x128xf32>
    %cst = arith.constant dense<0.000000e+00> : vector<8x128xf32>
    %3 = tpu.matmul %0, %2, %cst {dimension_numbers = #tpu.dot_dimension_numbers<[1], [0], [0], [1], [0, 0, 1, 1], [], []>} : vector<8x16xf32>, vector<16x128xf32>, vector<8x128xf32> -> vector<8x128xf32>
    %c0_5 = arith.constant 0 : index
    %c0_6 = arith.constant 0 : index
    %4 = vector.load %arg4[%c0_5, %c0_6] : memref<8x128xf32, #tpu.memory_space<vmem>>, vector<8x128xf32>
    %cst_7 = arith.constant dense<0.000000e+00> : vector<8x128xf32>
    %5 = tpu.matmul %1, %4, %cst_7 {dimension_numbers = #tpu.dot_dimension_numbers<[1], [0], [0], [1], [0, 0, 1, 1], [], []>} : vector<8x8xf32>, vector<8x128xf32>, vector<8x128xf32> -> vector<8x128xf32>
    %6 = arith.addf %3, %5 : vector<8x128xf32>
    %c0_8 = arith.constant 0 : index
    %c0_9 = arith.constant 0 : index
    %7 = vector.load %arg5[%c0_8, %c0_9] : memref<1x128xf32, #tpu.memory_space<vmem>>, vector<1x128xf32>
    %8 = vector.broadcast %7 : vector<1x128xf32> to vector<8x128xf32>
    %9 = arith.addf %6, %8 : vector<8x128xf32>
    %cst_10 = arith.constant 0.000000e+00 : f32
    %10 = vector.broadcast %cst_10 : f32 to vector<8x128xf32>
    %11 = arith.maximumf %9, %10 : vector<8x128xf32>
    %c0_11 = arith.constant 0 : index
    %c0_12 = arith.constant 0 : index
    %12 = vector.load %arg6[%c0_11, %c0_12] : memref<128x128xf32, #tpu.memory_space<vmem>>, vector<128x128xf32>
    %cst_13 = arith.constant dense<0.000000e+00> : vector<8x128xf32>
    %13 = tpu.matmul %11, %12, %cst_13 {dimension_numbers = #tpu.dot_dimension_numbers<[1], [0], [0], [1], [0, 0, 1, 1], [], []>} : vector<8x128xf32>, vector<128x128xf32>, vector<8x128xf32> -> vector<8x128xf32>
    %c0_14 = arith.constant 0 : index
    %c0_15 = arith.constant 0 : index
    %14 = vector.load %arg7[%c0_14, %c0_15] : memref<1x128xf32, #tpu.memory_space<vmem>>, vector<1x128xf32>
    %15 = vector.broadcast %14 : vector<1x128xf32> to vector<8x128xf32>
    %16 = arith.addf %13, %15 : vector<8x128xf32>
    %cst_16 = arith.constant 0.000000e+00 : f32
    %17 = vector.broadcast %cst_16 : f32 to vector<8x128xf32>
    %18 = arith.maximumf %16, %17 : vector<8x128xf32>
    %c0_17 = arith.constant 0 : index
    %c0_18 = arith.constant 0 : index
    %19 = vector.load %arg8[%c0_17, %c0_18] : memref<1x128xf32, #tpu.memory_space<vmem>>, vector<1x128xf32>
    %20 = vector.broadcast %19 : vector<1x128xf32> to vector<8x128xf32>
    %21 = arith.mulf %18, %20 : vector<8x128xf32>
    %cst_19 = arith.constant dense<0.000000e+00> : vector<8xf32>
    %22 = vector.multi_reduction <add>, %21, %cst_19 [1] : vector<8x128xf32> to vector<8xf32>
    %23 = vector.shape_cast %22 : vector<8xf32> to vector<8x1xf32>
    %c0_20 = arith.constant 0 : index
    %c0_21 = arith.constant 0 : index
    %24 = vector.load %arg9[%c0_20, %c0_21] : memref<1x1xf32, #tpu.memory_space<vmem>>, vector<1x1xf32>
    %25 = vector.broadcast %24 : vector<1x1xf32> to vector<8x1xf32>
    %26 = arith.addf %23, %25 : vector<8x1xf32>
    %c0_22 = arith.constant 0 : index
    %c0_23 = arith.constant 0 : index
    %27 = vector.load %arg10[%c0_22, %c0_23] : memref<8x1xf32, #tpu.memory_space<vmem>>, vector<8x1xf32>
    tpu.vector_store %arg10[%c0_22, %c0_23], %26 {strides = array<i32>} : memref<8x1xf32, #tpu.memory_space<vmem>>, vector<8x1xf32>,
    return
  }
  func.func @transform_0(%arg0: i32) -> (i32, i32) {
    %c0_i32 = arith.constant 0 : i32
    %c0_i32_0 = arith.constant 0 : i32
    return %arg0, %c0_i32 : i32, i32
  }
  func.func @transform_1(%arg0: i32) -> (i32, i32) {
    %c0_i32 = arith.constant 0 : i32
    %c0_i32_0 = arith.constant 0 : i32
    return %arg0, %c0_i32 : i32, i32
  }
  func.func @transform_2(%arg0: i32) -> (i32, i32) {
    %c0_i32 = arith.constant 0 : i32
    %c0_i32_0 = arith.constant 0 : i32
    %c0_i32_1 = arith.constant 0 : i32
    return %c0_i32, %c0_i32_0 : i32, i32
  }
  func.func @transform_3(%arg0: i32) -> (i32, i32) {
    %c0_i32 = arith.constant 0 : i32
    %c0_i32_0 = arith.constant 0 : i32
    %c0_i32_1 = arith.constant 0 : i32
    return %c0_i32, %c0_i32_0 : i32, i32
  }
  func.func @transform_4(%arg0: i32) -> (i32, i32) {
    %c0_i32 = arith.constant 0 : i32
    %c0_i32_0 = arith.constant 0 : i32
    %c0_i32_1 = arith.constant 0 : i32
    return %c0_i32, %c0_i32_0 : i32, i32
  }
  func.func @transform_5(%arg0: i32) -> (i32, i32) {
    %c0_i32 = arith.constant 0 : i32
    %c0_i32_0 = arith.constant 0 : i32
    %c0_i32_1 = arith.constant 0 : i32
    return %c0_i32, %c0_i32_0 : i32, i32
  }
  func.func @transform_6(%arg0: i32) -> (i32, i32) {
    %c0_i32 = arith.constant 0 : i32
    %c0_i32_0 = arith.constant 0 : i32
    %c0_i32_1 = arith.constant 0 : i32
    return %c0_i32, %c0_i32_0 : i32, i32
  }
  func.func @transform_7(%arg0: i32) -> (i32, i32) {
    %c0_i32 = arith.constant 0 : i32
    %c0_i32_0 = arith.constant 0 : i32
    %c0_i32_1 = arith.constant 0 : i32
    return %c0_i32, %c0_i32_0 : i32, i32
  }
  func.func @transform_8(%arg0: i32) -> (i32, i32) {
    %c0_i32 = arith.constant 0 : i32
    %c0_i32_0 = arith.constant 0 : i32
    %c0_i32_1 = arith.constant 0 : i32
    return %c0_i32, %c0_i32_0 : i32, i32
  }
  func.func @transform_9(%arg0: i32) -> (i32, i32) {
    %c0_i32 = arith.constant 0 : i32
    %c0_i32_0 = arith.constant 0 : i32
    return %arg0, %c0_i32 : i32, i32
  }
}

</mosaic_0001>

<llo_original>
// kernel: tpu_custom_call.1
$region0: #{tpu_custom_call.1}
  #allocation0 [shape = 'u32[]', space=smem, size = 0x4, offset = 0x4, fixed_abs, tag = 'smem constant byte address 0x4 - core index']
  #allocation1 [shape = 'u32[144,128]{1,0:T(1,128)}', space=vmem, size = 0x12000, scoped, tag = 'internal scratch']
  #allocation2 [shape = 'f32[1,1]{1,0:T(1,128)S(1)}', space=vmem, size = 0x200, scoped, tag = 'scoped memory for tpu_custom_call.1']
  %s0 = inlined_call_operand.hbm [shape: f32[8,16], index: 0, kind: input, shape index: {}]
  %s1 = inlined_call_operand.hbm [shape: f32[8,8], index: 1, kind: input, shape index: {}]
  %s2 = inlined_call_operand.hbm [shape: f32[16,128], index: 2, kind: input, shape index: {}]
  %s3 = inlined_call_operand.hbm [shape: f32[8,128], index: 3, kind: input, shape index: {}]
  %s4 = inlined_call_operand.vmem [shape: f32[1,128], index: 4, kind: input, shape index: {}]
  %s5 = inlined_call_operand.hbm [shape: f32[128,128], index: 5, kind: input, shape index: {}]
  %s6 = inlined_call_operand.vmem [shape: f32[1,128], index: 6, kind: input, shape index: {}]
  %s7 = inlined_call_operand.vmem [shape: f32[1,128], index: 7, kind: input, shape index: {}]
  %s8 = inlined_call_operand.<no memory space> [shape: f32[1,1], index: 8, kind: input, shape index: {}]
  %s9 = inlined_call_operand.vmem [shape: f32[8,1], index: 9, kind: output, shape index: {}]
  %s10 = sld [smem:[#allocation0]]
  $region66: #{tpu_custom_call.1} parent=0
    _
  %s12 = ssub.s32 1, %s10
  %s13 = scalar_select 0, %s12, %s10
  %v14 = vstv %s8
  %15 = vst [vmem:[#allocation2] sm:$0x1] %v14
  $region1: #{tpu_custom_call.1} parent=0
    #allocation3 [shape = 'u8[4096]{0}', space=vmem, size = 0x1000, scoped, tag = 'input window, operand 0, single buffered']
    #allocation4 [shape = 's32[1]{0}', space=sflag, size = 0x4, scoped, tag = 'scoped memory for tpu_custom_call.1']
    #allocation5 [shape = 'u8[4096]{0}', space=vmem, size = 0x1000, scoped, tag = 'input window, operand 1, single buffered']
    #allocation6 [shape = 's32[1]{0}', space=sflag, size = 0x4, scoped, tag = 'scoped memory for tpu_custom_call.1']
    #allocation7 [shape = 'u8[8192]{0}', space=vmem, size = 0x2000, scoped, tag = 'input window, operand 2, single buffered']
    #allocation8 [shape = 'u8[4096]{0}', space=vmem, size = 0x1000, scoped, tag = 'input window, operand 3, single buffered']
    #allocation9 [shape = 's32[1]{0}', space=sflag, size = 0x4, scoped, tag = 'scoped memory for tpu_custom_call.1']
    #allocation10 [shape = 'u8[65536]{0}', space=vmem, size = 0x10000, scoped, tag = 'input window, operand 5, single buffered']
    %16 = vsyncpa [#allocation4], 0
    %17 = vsyncpa [#allocation6], 0
    %18 = vsyncpa [#allocation9], 0
    // Predicated region
    $region2: #{tpu_custom_call.1} parent=1 // pred_check
      _
    $region3: #{tpu_custom_call.1} parent=1 // pred_check_branch
      %20 = sbr.rel (0) target = $region5
    $region4: #{tpu_custom_call.1} parent=1 // pred_region
      %s22 = ssub.s32 128, 128
      %23 = vsyncadd [#allocation4], %s22
      %s25 = sshll.u32 [#allocation3], 4
      %s26 = int_to_ptr.vmem [resolvable:$true] %s25
      %28 = dma.hbm_to_vmem [thread:$0]  %s0, 128, %s26, [#allocation4]
    $region5: #{tpu_custom_call.1} parent=1 // pred_fallthru
      _
    // Predicated region
    $region6: #{tpu_custom_call.1} parent=1 // pred_check
      _
    $region7: #{tpu_custom_call.1} parent=1 // pred_check_branch
      %30 = sbr.rel (0) target = $region9
    $region8: #{tpu_custom_call.1} parent=1 // pred_region
      %s32 = ssub.s32 128, 128
      %33 = vsyncadd [#allocation6], %s32
      %s35 = sshll.u32 [#allocation5], 4
      %s36 = int_to_ptr.vmem [resolvable:$true] %s35
      %38 = dma.hbm_to_vmem [thread:$0]  %s1, 128, %s36, [#allocation6]
    $region9: #{tpu_custom_call.1} parent=1 // pred_fallthru
      _
    // Predicated region
    $region10: #{tpu_custom_call.1} parent=1 // pred_check
      _
    $region11: #{tpu_custom_call.1} parent=1 // pred_check_branch
      %40 = sbr.rel (0) target = $region13
    $region12: #{tpu_custom_call.1} parent=1 // pred_region
      %s42 = ssub.s32 256, 256
      %43 = vsyncadd [#allocation6], %s42
      %s44 = sshll.u32 [#allocation7], 4
      %s45 = int_to_ptr.vmem [resolvable:$true] %s44
      %50 = dma.hbm_to_vmem [thread:$0]  %s2, 256, %s45, [#allocation6], 128, 128, 8
    $region13: #{tpu_custom_call.1} parent=1 // pred_fallthru
      _
    // Predicated region
    $region14: #{tpu_custom_call.1} parent=1 // pred_check
      _
    $region15: #{tpu_custom_call.1} parent=1 // pred_check_branch
      %52 = sbr.rel (0) target = $region17
    $region16: #{tpu_custom_call.1} parent=1 // pred_region
      %s54 = ssub.s32 128, 128
      %55 = vsyncadd [#allocation9], %s54
      %s57 = sshll.u32 [#allocation8], 4
      %s58 = int_to_ptr.vmem [resolvable:$true] %s57
      %60 = dma.hbm_to_vmem [thread:$0]  %s3, 128, %s58, [#allocation9]
    $region17: #{tpu_custom_call.1} parent=1 // pred_fallthru
      _
    // Predicated region
    $region18: #{tpu_custom_call.1} parent=1 // pred_check
      _
    $region19: #{tpu_custom_call.1} parent=1 // pred_check_branch
      %62 = sbr.rel (0) target = $region21
    $region20: #{tpu_custom_call.1} parent=1 // pred_region
      _
    $region21: #{tpu_custom_call.1} parent=1 // pred_fallthru
      _
    // Predicated region
    $region22: #{tpu_custom_call.1} parent=1 // pred_check
      _
    $region23: #{tpu_custom_call.1} parent=1 // pred_check_branch
      %64 = sbr.rel (0) target = $region25
    $region24: #{tpu_custom_call.1} parent=1 // pred_region
      %s66 = ssub.s32 2048, 2048
      %67 = vsyncadd [#allocation9], %s66
      %s68 = sshll.u32 [#allocation10], 4
      %s69 = int_to_ptr.vmem [resolvable:$true] %s68
      %74 = dma.hbm_to_vmem [thread:$0]  %s5, 2048, %s69, [#allocation9], 128, 128, 8
    $region25: #{tpu_custom_call.1} parent=1 // pred_fallthru
      _
    // Predicated region
    $region26: #{tpu_custom_call.1} parent=1 // pred_check
      _
    $region27: #{tpu_custom_call.1} parent=1 // pred_check_branch
      %76 = sbr.rel (0) target = $region29
    $region28: #{tpu_custom_call.1} parent=1 // pred_region
      _
    $region29: #{tpu_custom_call.1} parent=1 // pred_fallthru
      _
    // Predicated region
    $region30: #{tpu_custom_call.1} parent=1 // pred_check
      _
    $region31: #{tpu_custom_call.1} parent=1 // pred_check_branch
      %78 = sbr.rel (0) target = $region33
    $region32: #{tpu_custom_call.1} parent=1 // pred_region
      _
    $region33: #{tpu_custom_call.1} parent=1 // pred_fallthru
      _
    // Predicated region
    $region34: #{tpu_custom_call.1} parent=1 // pred_check
      _
    $region35: #{tpu_custom_call.1} parent=1 // pred_check_branch
      %80 = sbr.rel (0) target = $region37
    $region36: #{tpu_custom_call.1} parent=1 // pred_region
      _
    $region37: #{tpu_custom_call.1} parent=1 // pred_fallthru
      _
    // Predicated region
    $region38: #{tpu_custom_call.1} parent=1 // pred_check
      _
    $region39: #{tpu_custom_call.1} parent=1 // pred_check_branch
      %82 = sbr.rel (0) target = $region41
    $region40: #{tpu_custom_call.1} parent=1 // pred_region
      %83 = dma.done [#allocation4], 128
    $region41: #{tpu_custom_call.1} parent=1 // pred_fallthru
      _
    // Predicated region
    $region42: #{tpu_custom_call.1} parent=1 // pred_check
      _
    $region43: #{tpu_custom_call.1} parent=1 // pred_check_branch
      %85 = sbr.rel (0) target = $region45
    $region44: #{tpu_custom_call.1} parent=1 // pred_region
      %86 = dma.done [#allocation6], 128
    $region45: #{tpu_custom_call.1} parent=1 // pred_fallthru
      _
    // Predicated region
    $region46: #{tpu_custom_call.1} parent=1 // pred_check
      _
    $region47: #{tpu_custom_call.1} parent=1 // pred_check_branch
      %88 = sbr.rel (0) target = $region49
    $region48: #{tpu_custom_call.1} parent=1 // pred_region
      %89 = dma.done [#allocation6], 256
    $region49: #{tpu_custom_call.1} parent=1 // pred_fallthru
      _
    // Predicated region
    $region50: #{tpu_custom_call.1} parent=1 // pred_check
      _
    $region51: #{tpu_custom_call.1} parent=1 // pred_check_branch
      %91 = sbr.rel (0) target = $region53
    $region52: #{tpu_custom_call.1} parent=1 // pred_region
      %92 = dma.done [#allocation9], 128
    $region53: #{tpu_custom_call.1} parent=1 // pred_fallthru
      _
    // Predicated region
    $region54: #{tpu_custom_call.1} parent=1 // pred_check
      _
    $region55: #{tpu_custom_call.1} parent=1 // pred_check_branch
      %94 = sbr.rel (0) target = $region57
    $region56: #{tpu_custom_call.1} parent=1 // pred_region
      %95 = dma.done [#allocation9], 2048
    $region57: #{tpu_custom_call.1} parent=1 // pred_fallthru
      _
    %v96 = vld [vmem:[#allocation3] sm:$0xff]
    %v97 = vld [vmem:[#allocation5] sm:$0xff]
    %v98 = vld [vmem:[#allocation7] sm:$0xff]
    %v99 = vld [vmem:[#allocation7 + $0x8] sm:$0xff]
    %v100 = vld [vmem:[#allocation8] sm:$0xff]
    %vm101 = vcmask 64512
    %v103 = vsel %vm101, %v97, 0
    %105 = vmatprep.subr.mxu0 0.0
    %106 = vmatpush1.msra.mxu0 0.0
    %107 = vmatprep.subr.mxu0 0.0
    %108 = vmatpush1.msra.mxu0 0.0
    %109 = vmatprep.subr.mxu0 0.0
    %110 = vmatpush1.msra.mxu0 0.0
    %111 = vmatprep.subr.mxu0 0.0
    %112 = vmatpush1.msra.mxu0 0.0
    %113 = vmatprep.subr.mxu0 0.0
    %114 = vmatpush1.msra.mxu0 0.0
    %115 = vmatprep.subr.mxu0 0.0
    %116 = vmatpush1.msra.mxu0 0.0
    %117 = vmatprep.subr.mxu0 0.0
    %118 = vmatpush1.msra.mxu0 0.0
    %119 = vmatprep.subr.mxu0 0.0
    %120 = vmatpush1.msra.mxu0 0.0
    %121 = vmatprep.subr.mxu0 0.0
    %122 = vmatpush1.msra.mxu0 0.0
    %123 = vmatprep.subr.mxu0 0.0
    %124 = vmatpush1.msra.mxu0 0.0
    %125 = vmatprep.subr.mxu0 0.0
    %126 = vmatpush1.msra.mxu0 0.0
    %127 = vmatprep.subr.mxu0 0.0
    %128 = vmatpush1.msra.mxu0 0.0
    %129 = vmatprep.subr.mxu0 0.0
    %130 = vmatpush1.msra.mxu0 0.0
    %131 = vmatprep.subr.mxu0 0.0
    %132 = vmatpush1.msra.mxu0 0.0
    %133 = vmatprep.subr.mxu0 0.0
    %134 = vmatpush1.msra.mxu0 0.0
    %135 = vmatprep.subr.mxu0 0.0
    %136 = vmatpush1.msra.mxu0 %v100
    %137 = vmatprep.subr.mxu0 0.0
    %138 = vmatpush2.msra.mxu0 0.0
    %139 = vmatprep.subr.mxu0 0.0
    %140 = vmatpush2.msra.mxu0 0.0
    %141 = vmatprep.subr.mxu0 0.0
    %142 = vmatpush2.msra.mxu0 0.0
    %143 = vmatprep.subr.mxu0 0.0
    %144 = vmatpush2.msra.mxu0 0.0
    %145 = vmatprep.subr.mxu0 0.0
    %146 = vmatpush2.msra.mxu0 0.0
    %147 = vmatprep.subr.mxu0 0.0
    %148 = vmatpush2.msra.mxu0 0.0
    %149 = vmatprep.subr.mxu0 0.0
    %150 = vmatpush2.msra.mxu0 0.0
    %151 = vmatprep.subr.mxu0 0.0
    %152 = vmatpush2.msra.mxu0 0.0
    %153 = vmatprep.subr.mxu0 0.0
    %154 = vmatpush2.msra.mxu0 0.0
    %155 = vmatprep.subr.mxu0 0.0
    %156 = vmatpush2.msra.mxu0 0.0
    %157 = vmatprep.subr.mxu0 0.0
    %158 = vmatpush2.msra.mxu0 0.0
    %159 = vmatprep.subr.mxu0 0.0
    %160 = vmatpush2.msra.mxu0 0.0
    %161 = vmatprep.subr.mxu0 0.0
    %162 = vmatpush2.msra.mxu0 0.0
    %163 = vmatprep.subr.mxu0 0.0
    %164 = vmatpush2.msra.mxu0 0.0
    %165 = vmatprep.subr.mxu0 0.0
    %166 = vmatpush2.msra.mxu0 0.0
    %167 = vmatprep.subr.mxu0 0.0
    %168 = vmatpush2.msra.mxu0 0.0
    %169 = vmatprep.mubr.f32.mxu0 0.0
    %170 = vmatmul.mubr.f32.gmra.mxu0 %v103
    %v171 = vpop.f32.mrf.mxu0
    %v172 = vadd.f32 0.0, %v171
    %v173 = vpop.f32.mrf.mxu0
    %174 = vdwg.mxu0
    %vm175 = vcmask 130048
    %v177 = vsel %vm175, %v96, 0
    %179 = vmatprep.subr.mxu0 0.0
    %180 = vmatpush1.msra.mxu0 0.0
    %181 = vmatprep.subr.mxu0 0.0
    %182 = vmatpush1.msra.mxu0 0.0
    %183 = vmatprep.subr.mxu0 0.0
    %184 = vmatpush1.msra.mxu0 0.0
    %185 = vmatprep.subr.mxu0 0.0
    %186 = vmatpush1.msra.mxu0 0.0
    %187 = vmatprep.subr.mxu0 0.0
    %188 = vmatpush1.msra.mxu0 0.0
    %189 = vmatprep.subr.mxu0 0.0
    %190 = vmatpush1.msra.mxu0 0.0
    %191 = vmatprep.subr.mxu0 0.0
    %192 = vmatpush1.msra.mxu0 0.0
    %193 = vmatprep.subr.mxu0 0.0
    %194 = vmatpush1.msra.mxu0 0.0
    %195 = vmatprep.subr.mxu0 0.0
    %196 = vmatpush1.msra.mxu0 0.0
    %197 = vmatprep.subr.mxu0 0.0
    %198 = vmatpush1.msra.mxu0 0.0
    %199 = vmatprep.subr.mxu0 0.0
    %200 = vmatpush1.msra.mxu0 0.0
    %201 = vmatprep.subr.mxu0 0.0
    %202 = vmatpush1.msra.mxu0 0.0
    %203 = vmatprep.subr.mxu0 0.0
    %204 = vmatpush1.msra.mxu0 0.0
    %205 = vmatprep.subr.mxu0 0.0
    %206 = vmatpush1.msra.mxu0 0.0
    %207 = vmatprep.subr.mxu0 0.0
    %208 = vmatpush1.msra.mxu0 %v99
    %209 = vmatprep.subr.mxu0 0.0
    %210 = vmatpush1.msra.mxu0 %v98
    %211 = vmatprep.subr.mxu0 0.0
    %212 = vmatpush2.msra.mxu0 0.0
    %213 = vmatprep.subr.mxu0 0.0
    %214 = vmatpush2.msra.mxu0 0.0
    %215 = vmatprep.subr.mxu0 0.0
    %216 = vmatpush2.msra.mxu0 0.0
    %217 = vmatprep.subr.mxu0 0.0
    %218 = vmatpush2.msra.mxu0 0.0
    %219 = vmatprep.subr.mxu0 0.0
    %220 = vmatpush2.msra.mxu0 0.0
    %221 = vmatprep.subr.mxu0 0.0
    %222 = vmatpush2.msra.mxu0 0.0
    %223 = vmatprep.subr.mxu0 0.0
    %224 = vmatpush2.msra.mxu0 0.0
    %225 = vmatprep.subr.mxu0 0.0
    %226 = vmatpush2.msra.mxu0 0.0
    %227 = vmatprep.subr.mxu0 0.0
    %228 = vmatpush2.msra.mxu0 0.0
    %229 = vmatprep.subr.mxu0 0.0
    %230 = vmatpush2.msra.mxu0 0.0
    %231 = vmatprep.subr.mxu0 0.0
    %232 = vmatpush2.msra.mxu0 0.0
    %233 = vmatprep.subr.mxu0 0.0
    %234 = vmatpush2.msra.mxu0 0.0
    %235 = vmatprep.subr.mxu0 0.0
    %236 = vmatpush2.msra.mxu0 0.0
    %237 = vmatprep.subr.mxu0 0.0
    %238 = vmatpush2.msra.mxu0 0.0
    %239 = vmatprep.subr.mxu0 0.0
    %240 = vmatpush2.msra.mxu0 0.0
    %241 = vmatprep.subr.mxu0 0.0
    %242 = vmatpush2.msra.mxu0 0.0
    %243 = vmatprep.mubr.f32.mxu0 0.0
    %244 = vmatmul.mubr.f32.gmra.mxu0 %v177
    %v245 = vpop.f32.mrf.mxu0
    %v246 = vadd.f32 %v172, %v245
    %v247 = vpop.f32.mrf.mxu0
    %248 = vdwg.mxu0
    %v249 = vld [vmem:[%s4] sm:$0x1]
    %v251 = vlaneseq
    %v252 = vshrl.u32 %v251, 7
    %v253 = vsub.s32 0, %v252
    %v254 = vrot.slane %v249, %v253
    %v256 = vadd.f32 %v246, %v254
    %v257 = vmax.f32 %v256, 0.0
    %v258 = vld [vmem:[#allocation10] sm:$0xff]
    %v259 = vld [vmem:[#allocation10 + $0x8] sm:$0xff]
    %v260 = vld [vmem:[#allocation10 + $0x10] sm:$0xff]
    %v261 = vld [vmem:[#allocation10 + $0x18] sm:$0xff]
    %v262 = vld [vmem:[#allocation10 + $0x20] sm:$0xff]
    %v263 = vld [vmem:[#allocation10 + $0x28] sm:$0xff]
    %v264 = vld [vmem:[#allocation10 + $0x30] sm:$0xff]
    %v265 = vld [vmem:[#allocation10 + $0x38] sm:$0xff]
    %v266 = vld [vmem:[#allocation10 + $0x40] sm:$0xff]
    %v267 = vld [vmem:[#allocation10 + $0x48] sm:$0xff]
    %v268 = vld [vmem:[#allocation10 + $0x50] sm:$0xff]
    %v269 = vld [vmem:[#allocation10 + $0x58] sm:$0xff]
    %v270 = vld [vmem:[#allocation10 + $0x60] sm:$0xff]
    %v271 = vld [vmem:[#allocation10 + $0x68] sm:$0xff]
    %v272 = vld [vmem:[#allocation10 + $0x70] sm:$0xff]
    %v273 = vld [vmem:[#allocation10 + $0x78] sm:$0xff]
    %v274 = vld [vmem:[%s6] sm:$0x1]
    %v276 = vlaneseq
    %v277 = vshrl.u32 %v276, 7
    %v278 = vsub.s32 0, %v277
    %v279 = vrot.slane %v274, %v278
    %281 = vmatprep.subr.mxu0 0.0
    %282 = vmatpush1.msra.mxu0 %v273
    %283 = vmatprep.subr.mxu0 0.0
    %284 = vmatpush1.msra.mxu0 %v272
    %285 = vmatprep.subr.mxu0 0.0
    %286 = vmatpush1.msra.mxu0 %v271
    %287 = vmatprep.subr.mxu0 0.0
    %288 = vmatpush1.msra.mxu0 %v270
    %289 = vmatprep.subr.mxu0 0.0
    %290 = vmatpush1.msra.mxu0 %v269
    %291 = vmatprep.subr.mxu0 0.0
    %292 = vmatpush1.msra.mxu0 %v268
    %293 = vmatprep.subr.mxu0 0.0
    %294 = vmatpush1.msra.mxu0 %v267
    %295 = vmatprep.subr.mxu0 0.0
    %296 = vmatpush1.msra.mxu0 %v266
    %297 = vmatprep.subr.mxu0 0.0
    %298 = vmatpush1.msra.mxu0 %v265
    %299 = vmatprep.subr.mxu0 0.0
    %300 = vmatpush1.msra.mxu0 %v264
    %301 = vmatprep.subr.mxu0 0.0
    %302 = vmatpush1.msra.mxu0 %v263
    %303 = vmatprep.subr.mxu0 0.0
    %304 = vmatpush1.msra.mxu0 %v262
    %305 = vmatprep.subr.mxu0 0.0
    %306 = vmatpush1.msra.mxu0 %v261
    %307 = vmatprep.subr.mxu0 0.0
    %308 = vmatpush1.msra.mxu0 %v260
    %309 = vmatprep.subr.mxu0 0.0
    %310 = vmatpush1.msra.mxu0 %v259
    %311 = vmatprep.subr.mxu0 0.0
    %312 = vmatpush1.msra.mxu0 %v258
    %313 = vmatprep.subr.mxu0 0.0
    %314 = vmatpush2.msra.mxu0 0.0
    %315 = vmatprep.subr.mxu0 0.0
    %316 = vmatpush2.msra.mxu0 0.0
    %317 = vmatprep.subr.mxu0 0.0
    %318 = vmatpush2.msra.mxu0 0.0
    %319 = vmatprep.subr.mxu0 0.0
    %320 = vmatpush2.msra.mxu0 0.0
    %321 = vmatprep.subr.mxu0 0.0
    %322 = vmatpush2.msra.mxu0 0.0
    %323 = vmatprep.subr.mxu0 0.0
    %324 = vmatpush2.msra.mxu0 0.0
    %325 = vmatprep.subr.mxu0 0.0
    %326 = vmatpush2.msra.mxu0 0.0
    %327 = vmatprep.subr.mxu0 0.0
    %328 = vmatpush2.msra.mxu0 0.0
    %329 = vmatprep.subr.mxu0 0.0
    %330 = vmatpush2.msra.mxu0 0.0
    %331 = vmatprep.subr.mxu0 0.0
    %332 = vmatpush2.msra.mxu0 0.0
    %333 = vmatprep.subr.mxu0 0.0
    %334 = vmatpush2.msra.mxu0 0.0
    %335 = vmatprep.subr.mxu0 0.0
    %336 = vmatpush2.msra.mxu0 0.0
    %337 = vmatprep.subr.mxu0 0.0
    %338 = vmatpush2.msra.mxu0 0.0
    %339 = vmatprep.subr.mxu0 0.0
    %340 = vmatpush2.msra.mxu0 0.0
    %341 = vmatprep.subr.mxu0 0.0
    %342 = vmatpush2.msra.mxu0 0.0
    %343 = vmatprep.subr.mxu0 0.0
    %344 = vmatpush2.msra.mxu0 0.0
    %345 = vmatprep.mubr.f32.mxu0 0.0
    %346 = vmatmul.mubr.f32.gmra.mxu0 %v257
    %v347 = vpop.f32.mrf.mxu0
    %v348 = vadd.f32 %v279, %v347
    %v349 = vpop.f32.mrf.mxu0
    %350 = vdwg.mxu0
    %v351 = vmax.f32 %v348, 0.0
    %v352 = vld [vmem:[%s7] sm:$0x1]
    %v354 = vlaneseq
    %v355 = vshrl.u32 %v354, 7
    %v356 = vsub.s32 0, %v355
    %v357 = vrot.slane %v352, %v356
    %v359 = vmul.f32 %v351, %v357
    %360 = vadd.xlane.f32.xlu0 %v359
    %v361 = vpop.xlane.xlu0 %360
    %v362 = vld [vmem:[#allocation2] sm:$0x1]
    %v364 = vlaneseq
    %v365 = vshrl.u32 %v364, 7
    %v366 = vsub.s32 0, %v365
    %v367 = vrot.slane %v362, %v366
    %v369 = vadd.f32 %v361, %v367
    %vm370 = vcmask 7168
    %371 = vst.msk [vmem:[%s9] sm:$0xff] %vm370, %v369
    // Predicated region
    $region58: #{tpu_custom_call.1} parent=1 // pred_check
      _
    $region59: #{tpu_custom_call.1} parent=1 // pred_check_branch
      %373 = sbr.rel (0) target = $region61
    $region60: #{tpu_custom_call.1} parent=1 // pred_region
      _
    $region61: #{tpu_custom_call.1} parent=1 // pred_fallthru
      _
    // Predicated region
    $region62: #{tpu_custom_call.1} parent=1 // pred_check
      _
    $region63: #{tpu_custom_call.1} parent=1 // pred_check_branch
      %375 = sbr.rel (0) target = $region65
    $region64: #{tpu_custom_call.1} parent=1 // pred_region
      _
    $region65: #{tpu_custom_call.1} parent=1 // pred_fallthru
      _
    %376 = vsyncpa [#allocation4], 1
    %377 = vsyncpa [#allocation6], 1
    %378 = vsyncpa [#allocation9], 1

</llo_original>
